<compile_context>
chip_gen: v7x
topology: tpu7x:2x2x1
jax: 0.10.0
libtpu: 0.0.40
codegen_flags: <defaults>
</compile_context>

<pallas_src>
import functools

import jax
import jax.numpy as jnp
from jax.experimental import pallas as pl
from jax.experimental.pallas import tpu as pltpu


_BLOCK_BYTES = 2 * 1024 * 1024   # ~2 MiB per block buffer (v5e-safe, see header)
_ROW_CAP = 256                   # multiple of sublane packing for f32/bf16/int8


def _tiles(rows: int, cols: int, dtype):
    """Byte-budget tile chooser.  A dim that fits whole is used exactly (a full
    array dim is always a legal block dim, aligned or not); larger dims get an
    aligned cap and Pallas masks the ragged last block."""
    itemsize = jnp.dtype(dtype).itemsize
    tr = rows if rows <= _ROW_CAP else _ROW_CAP
    budget_cols = max(128, (_BLOCK_BYTES // (tr * itemsize)) // 128 * 128)
    tc = cols if cols <= budget_cols else budget_cols
    return tr, tc


def _slab_view(x: jax.Array) -> jax.Array:
    """Copy-free 2-D view of x for the tensor-wise path: pick a lane-dense
    factorization (cols multiple of 128, rows >= 8 when possible) so loads and
    stores stay unmasked.  Falls back to (1, n) for sizes that are not a
    multiple of 128 (rare; correct but sublane-sparse)."""
    n = x.size
    fallback = None
    for cols in (4096, 2048, 1024, 512, 256, 128):
        if n % cols == 0:
            if n // cols >= 8:
                return x.reshape(n // cols, cols)
            if fallback is None:
                fallback = (n // cols, cols)
    if fallback is not None:
        return x.reshape(fallback)
    return x.reshape(1, n)


# ----------------------------------------------------------------------------
# Kernel 1: per-row min / max reduction (tiled, accumulator resident over cols)
# ----------------------------------------------------------------------------
def _row_minmax_kernel(x_ref, min_ref, max_ref, *, cols: int, tc: int):
    # Column (reduction) axis is the LAST grid axis; the (tr, 1) outputs map to
    # the same block for every j, so they stay VMEM-resident (accumulators).
    j = pl.program_id(1)

    @pl.when(j == 0)
    def _():
        # Init to 0 folds in the reference's min(x.min(),0) / max(x.max(),0)
        # clamp AND makes the masked ragged lanes neutral.
        min_ref[...] = jnp.zeros_like(min_ref)
        max_ref[...] = jnp.zeros_like(max_ref)

    x = x_ref[...].astype(jnp.float32)
    if cols % tc:  # static: only emitted when a ragged column tile exists
        col = jax.lax.broadcasted_iota(jnp.int32, x.shape, 1)
        x = jnp.where(j * tc + col < cols, x, 0.0)
    min_ref[...] = jnp.minimum(min_ref[...], jnp.min(x, axis=-1, keepdims=True))
    max_ref[...] = jnp.maximum(max_ref[...], jnp.max(x, axis=-1, keepdims=True))


def row_minmax(x2d: jax.Array, tiles=None):
    """Per-row (min(x,0), max(x,0)) of a 2-D slab in f32, tiled + pipelined."""
    R, K = x2d.shape
    tr, tc = tiles or _tiles(R, K, x2d.dtype)
    grid = (pl.cdiv(R, tr), pl.cdiv(K, tc))
    kernel = functools.partial(_row_minmax_kernel, cols=K, tc=tc)
    mn, mx = pl.pallas_call(
        kernel,
        out_shape=(jax.ShapeDtypeStruct((R, 1), jnp.float32),
                   jax.ShapeDtypeStruct((R, 1), jnp.float32)),
        grid_spec=pltpu.PrefetchScalarGridSpec(
            num_scalar_prefetch=0,
            grid=grid,
            in_specs=[pl.BlockSpec((tr, tc), lambda i, j: (i, j))],
            out_specs=(pl.BlockSpec((tr, 1), lambda i, j: (i, 0)),
                       pl.BlockSpec((tr, 1), lambda i, j: (i, 0)))),
        compiler_params=pltpu.CompilerParams(
            dimension_semantics=("parallel", "arbitrary")),
    )(x2d)
    return mn, mx


# ----------------------------------------------------------------------------
# Kernel 2: quantize / dequantize elementwise hot path (tiled 2-D grid)
#   x_int   = round(x * inv_delta) + zero_point     (round-half-to-even)
#   x_quant = clamp(x_int, 0, n_levels - 1)
#   x_deq   = (x_quant - zero_point) * delta
# Note: uses a precomputed reciprocal (x * 1/delta) instead of torch's x/delta;
# a 1-ulp difference at an exact .5 boundary could shift a value by one level.
# ----------------------------------------------------------------------------
def _qdq_rowwise_kernel(x_ref, d_ref, inv_d_ref, zp_ref, o_ref, *, qmax: float):
    x = x_ref[...].astype(jnp.float32)            # (tr, tc) -- f32 math
    d = d_ref[...]                                # (tr, 1) f32, per-row
    inv_d = inv_d_ref[...]                        # (tr, 1) f32, hoisted 1/delta
    zp = zp_ref[...]                              # (tr, 1) f32
    x_q = jnp.clip(jnp.round(x * inv_d) + zp, 0.0, qmax)
    o_ref[...] = ((x_q - zp) * d).astype(o_ref.dtype)


def _qdq_scalar_kernel(x_ref, p_ref, o_ref, *, qmax: float):
    d = p_ref[0]                                  # SMEM scalars: delta,
    inv_d = p_ref[1]                              #   1/delta,
    zp = p_ref[2]                                 #   zero_point
    x = x_ref[...].astype(jnp.float32)
    x_q = jnp.clip(jnp.round(x * inv_d) + zp, 0.0, qmax)
    o_ref[...] = ((x_q - zp) * d).astype(o_ref.dtype)


def quant_dequant_rowwise(x2d, delta_col, inv_delta_col, zp_col, n_levels,
                          tiles=None):
    """Channel-wise quant-dequant: per-row f32 scale columns of shape (R, 1)."""
    R, K = x2d.shape
    tr, tc = tiles or _tiles(R, K, x2d.dtype)
    grid = (pl.cdiv(R, tr), pl.cdiv(K, tc))
    kernel = functools.partial(_qdq_rowwise_kernel, qmax=float(n_levels - 1))
    return pl.pallas_call(
        kernel,
        out_shape=jax.ShapeDtypeStruct((R, K), x2d.dtype),
        grid_spec=pltpu.PrefetchScalarGridSpec(
            num_scalar_prefetch=0,
            grid=grid,
            in_specs=[pl.BlockSpec((tr, tc), lambda i, j: (i, j)),
                      pl.BlockSpec((tr, 1), lambda i, j: (i, 0)),
                      pl.BlockSpec((tr, 1), lambda i, j: (i, 0)),
                      pl.BlockSpec((tr, 1), lambda i, j: (i, 0))],
            out_specs=pl.BlockSpec((tr, tc), lambda i, j: (i, j))),
        compiler_params=pltpu.CompilerParams(
            dimension_semantics=("parallel", "parallel")),
    )(x2d, delta_col, inv_delta_col, zp_col)


def quant_dequant_scalar(x2d, params, n_levels, tiles=None):
    """Tensor-wise quant-dequant: params = f32[3] = [delta, 1/delta, zp] in SMEM."""
    R, K = x2d.shape
    tr, tc = tiles or _tiles(R, K, x2d.dtype)
    grid = (pl.cdiv(R, tr), pl.cdiv(K, tc))
    kernel = functools.partial(_qdq_scalar_kernel, qmax=float(n_levels - 1))
    return pl.pallas_call(
        kernel,
        out_shape=jax.ShapeDtypeStruct((R, K), x2d.dtype),
        grid_spec=pltpu.PrefetchScalarGridSpec(
            num_scalar_prefetch=0,
            grid=grid,
            in_specs=[pl.BlockSpec((tr, tc), lambda i, j: (i, j)),
                      pl.BlockSpec(memory_space=pltpu.MemorySpace.SMEM)],
            out_specs=pl.BlockSpec((tr, tc), lambda i, j: (i, j))),
        compiler_params=pltpu.CompilerParams(
            dimension_semantics=("parallel", "parallel")),
    )(x2d, params)


# ----------------------------------------------------------------------------
# Wrapper mirroring UniformAffineQuantizer forward semantics ('max' methods)
# ----------------------------------------------------------------------------
class UniformAffineQuantizerPallas:
    def __init__(self, n_bits: int = 8, symmetric: bool = False,
                 channel_wise: bool = False, scale_method: str = 'max',
                 leaf_param: bool = False):
        assert 2 <= n_bits <= 8, 'bitwidth not supported'
        self.sym = symmetric
        self.n_bits = n_bits
        self.n_levels = 2 ** n_bits
        self.channel_wise = channel_wise
        self.scale_method = scale_method
        self.leaf_param = leaf_param
        self.delta = None        # f32, (C, 1) if channel_wise else (1, 1)
        self.inv_delta = None    # f32, hoisted reciprocal for the hot path
        self.zero_point = None   # f32
        self.inited = False

    def _init_quantization_scale(self, x: jax.Array):
        if 'max' not in self.scale_method:
            # TODO(synk): scale_method='mse' (80-step lp_loss search) is not implemented.
            raise NotImplementedError("only 'max'-family scale methods implemented")

        if self.channel_wise:
            x2d = x.reshape(x.shape[0], -1)             # (C, rest), copy-free
            x_min, x_max = row_minmax(x2d)              # already clamped vs 0
        else:
            x2d = _slab_view(x)                         # copy-free 2-D view
            mn, mx = row_minmax(x2d)
            x_min = jnp.min(mn).reshape(1, 1)           # (1, 1)
            x_max = jnp.max(mx).reshape(1, 1)

        if 'scale' in self.scale_method:
            x_min = x_min * (self.n_bits + 2) / 8
            x_max = x_max * (self.n_bits + 2) / 8

        x_absmax = jnp.maximum(jnp.abs(x_min), x_max)
        if self.sym:
            x_min = jnp.where(x_min < 0, -x_absmax, 0.0)
            x_max = x_absmax

        delta = (x_max - x_min) / (self.n_levels - 1)
        delta = jnp.maximum(delta, 1e-8)                 # torch clamps tiny range
        zero_point = jnp.round(-x_min / delta)
        # Keep scales in f32 (matches PyTorch's fp32 scale math even for bf16 x).
        return delta.astype(jnp.float32), zero_point.astype(jnp.float32)

    def __call__(self, x: jax.Array):
        if not self.inited:
            self.delta, self.zero_point = self._init_quantization_scale(x)
            self.inv_delta = 1.0 / self.delta   # hoisted once; kernel only multiplies
            self.inited = True

        orig_shape = x.shape
        if self.channel_wise:
            x2d = x.reshape(orig_shape[0], -1)
            y2d = quant_dequant_rowwise(x2d, self.delta, self.inv_delta,
                                        self.zero_point, self.n_levels)
            return y2d.reshape(orig_shape)

        # Tensor-wise: copy-free slab view; scales travel as 3 SMEM scalars.
        x2d = _slab_view(x)
        params = jnp.concatenate([self.delta.reshape(1),
                                  self.inv_delta.reshape(1),
                                  self.zero_point.reshape(1)]).astype(jnp.float32)
        y2d = quant_dequant_scalar(x2d, params, self.n_levels)
        return y2d.reshape(orig_shape)


# ----------------------------------------------------------------------------
# Pure-JAX reference (same math, no Pallas) for a sanity check
# ----------------------------------------------------------------------------
def _reference(x, n_bits, channel_wise, symmetric, scale_method='max'):
    n_levels = 2 ** n_bits
    if channel_wise:
        x2d = x.reshape(x.shape[0], -1)
    else:
        x2d = x.reshape(1, -1)
    x_min = jnp.minimum(jnp.min(x2d, axis=-1, keepdims=True), 0.0)
    x_max = jnp.maximum(jnp.max(x2d, axis=-1, keepdims=True), 0.0)
    if 'scale' in scale_method:
        x_min = x_min * (n_bits + 2) / 8
        x_max = x_max * (n_bits + 2) / 8
    x_absmax = jnp.maximum(jnp.abs(x_min), x_max)
    if symmetric:
        x_min = jnp.where(x_min < 0, -x_absmax, 0.0)
        x_max = x_absmax
    delta = (x_max - x_min) / (n_levels - 1)
    delta = jnp.maximum(delta, 1e-8)
    zp = jnp.round(-x_min / delta)
    inv_d = 1.0 / delta                      # same hoisted-reciprocal math as kernel
    x_int = jnp.round(x2d * inv_d) + zp
    x_q = jnp.clip(x_int, 0.0, n_levels - 1)
    return ((x_q - zp) * delta).reshape(x.shape)


if __name__ == "__main__":
    key = jax.random.PRNGKey(0)
    k0, k1, k2, k3 = jax.random.split(key, 4)

    x = jax.random.normal(k0, (2, 4, 16, 16), dtype=jnp.float32)   # NCHW

    # tensor-wise (default) quantizer
    q_tensor = UniformAffineQuantizerPallas(n_bits=8, symmetric=False,
                                            channel_wise=False, scale_method='max')
    y_tensor = q_tensor(x)
    jax.block_until_ready(y_tensor)

    # channel-wise quantizer (channel axis = dim 0, as in the PyTorch module)
    q_channel = UniformAffineQuantizerPallas(n_bits=8, symmetric=False,
                                             channel_wise=True, scale_method='max')
    y_channel = q_channel(x)
    jax.block_until_ready(y_channel)

    # symmetric 4-bit channel-wise
    q_sym = UniformAffineQuantizerPallas(n_bits=4, symmetric=True,
                                         channel_wise=True, scale_method='max')
    y_sym = q_sym(x)
    jax.block_until_ready(y_sym)

    # medium shape: small channel count -> lane tile grows toward full width
    x_big = jax.random.normal(k2, (4, 8, 64, 64), dtype=jnp.float32)
    q_big = UniformAffineQuantizerPallas(n_bits=8, symmetric=False,
                                         channel_wise=True, scale_method='max')
    y_big = q_big(x_big)
    jax.block_until_ready(y_big)

    # odd (non-128-multiple) tensor-wise shape -> (1, n) slab fallback, no pad
    x_odd = jax.random.normal(k1, (3, 5, 7), dtype=jnp.float32)
    q_odd = UniformAffineQuantizerPallas(n_bits=6, symmetric=False,
                                         channel_wise=False, scale_method='max')
    y_odd = q_odd(x_odd)
    jax.block_until_ready(y_odd)

    # ragged / multi-tile boundary check with forced small tiles (both kernels)
    xr = jax.random.normal(k3, (20, 192), dtype=jnp.float32)
    mn, mx = row_minmax(xr, tiles=(8, 128))
    jax.block_until_ready((mn, mx))
    ref_mn = jnp.minimum(jnp.min(xr, axis=1, keepdims=True), 0.0)
    ref_mx = jnp.maximum(jnp.max(xr, axis=1, keepdims=True), 0.0)
    assert jnp.allclose(mn, ref_mn) and jnp.allclose(mx, ref_mx), \
        "ragged reduction mismatch"
    d = jnp.maximum((ref_mx - ref_mn) / 255.0, 1e-8)
    zp = jnp.round(-ref_mn / d)
    yr = quant_dequant_rowwise(xr, d, 1.0 / d, zp, 256, tiles=(8, 128))
    jax.block_until_ready(yr)
    ref_yr = (jnp.clip(jnp.round(xr * (1.0 / d)) + zp, 0.0, 255.0) - zp) * d
    assert jnp.allclose(yr, ref_yr, atol=1e-6), "ragged quant-dequant mismatch"

    # sanity-check against pure-JAX reference
    assert jnp.allclose(y_tensor, _reference(x, 8, False, False), atol=1e-6), \
        "tensor-wise mismatch"
    assert jnp.allclose(y_channel, _reference(x, 8, True, False), atol=1e-6), \
        "channel-wise mismatch"
    assert jnp.allclose(y_sym, _reference(x, 4, True, True), atol=1e-6), \
        "symmetric mismatch"
    assert jnp.allclose(y_big, _reference(x_big, 8, True, False), atol=1e-5), \
        "medium-shape mismatch"
    assert jnp.allclose(y_odd, _reference(x_odd, 6, False, False), atol=1e-6), \
        "odd-shape mismatch"

    print("KERNEL_OK")
</pallas_src>

<mosaic_0001>
module attributes {stable_mosaic.version = 11 : i64} {
  func.func @_row_minmax_kernel(%arg0: i32, %arg1: i32, %arg2: memref<8x256xf32, #tpu.memory_space<vmem>>, %arg3: memref<8x1xf32, #tpu.memory_space<vmem>>, %arg4: memref<8x1xf32, #tpu.memory_space<vmem>>) attributes {dimension_semantics = [#tpu.dimension_semantics<parallel>, #tpu.dimension_semantics<arbitrary>], iteration_bounds = array<i64: 1, 1>, scalar_prefetch = 0 : i64, scratch_operands = 0 : i64, tpu.core_type = #tpu.core_type<tc>, window_params = [{transform_indices = @transform_0, window_bounds = array<i64: 8, 256>}, {transform_indices = @transform_1, window_bounds = array<i64: 8, 1>}, {transform_indices = @transform_2, window_bounds = array<i64: 8, 1>}]} {
    %c0_i32 = arith.constant 0 : i32
    %0 = arith.cmpi eq, %arg1, %c0_i32 : i32
    %1 = arith.extui %0 : i1 to i32
    %c0_i32_0 = arith.constant 0 : i32
    %2 = arith.cmpi ne, %1, %c0_i32_0 : i32
    scf.if %2 {
      %cst_11 = arith.constant 0.000000e+00 : f32
      %14 = vector.broadcast %cst_11 : f32 to vector<8x1xf32>
      %c0_12 = arith.constant 0 : index
      %c0_13 = arith.constant 0 : index
      %15 = vector.load %arg3[%c0_12, %c0_13] : memref<8x1xf32, #tpu.memory_space<vmem>>, vector<8x1xf32>
      tpu.vector_store %arg3[%c0_12, %c0_13], %14 {strides = array<i32>} : memref<8x1xf32, #tpu.memory_space<vmem>>, vector<8x1xf32>,
      %cst_14 = arith.constant 0.000000e+00 : f32
      %16 = vector.broadcast %cst_14 : f32 to vector<8x1xf32>
      %c0_15 = arith.constant 0 : index
      %c0_16 = arith.constant 0 : index
      %17 = vector.load %arg4[%c0_15, %c0_16] : memref<8x1xf32, #tpu.memory_space<vmem>>, vector<8x1xf32>
      tpu.vector_store %arg4[%c0_15, %c0_16], %16 {strides = array<i32>} : memref<8x1xf32, #tpu.memory_space<vmem>>, vector<8x1xf32>,
    } else {
    }
    %c0 = arith.constant 0 : index
    %c0_1 = arith.constant 0 : index
    %3 = vector.load %arg2[%c0, %c0_1] : memref<8x256xf32, #tpu.memory_space<vmem>>, vector<8x256xf32>
    %c0_2 = arith.constant 0 : index
    %c0_3 = arith.constant 0 : index
    %4 = vector.load %arg3[%c0_2, %c0_3] : memref<8x1xf32, #tpu.memory_space<vmem>>, vector<8x1xf32>
    %cst = arith.constant dense<0x7F800000> : vector<8xf32>
    %5 = vector.multi_reduction <minimumf>, %3, %cst [1] : vector<8x256xf32> to vector<8xf32>
    %6 = vector.shape_cast %5 : vector<8xf32> to vector<8x1xf32>
    %7 = arith.minimumf %4, %6 : vector<8x1xf32>
    %c0_4 = arith.constant 0 : index
    %c0_5 = arith.constant 0 : index
    %8 = vector.load %arg3[%c0_4, %c0_5] : memref<8x1xf32, #tpu.memory_space<vmem>>, vector<8x1xf32>
    tpu.vector_store %arg3[%c0_4, %c0_5], %7 {strides = array<i32>} : memref<8x1xf32, #tpu.memory_space<vmem>>, vector<8x1xf32>,
    %c0_6 = arith.constant 0 : index
    %c0_7 = arith.constant 0 : index
    %9 = vector.load %arg4[%c0_6, %c0_7] : memref<8x1xf32, #tpu.memory_space<vmem>>, vector<8x1xf32>
    %cst_8 = arith.constant dense<0xFF800000> : vector<8xf32>
    %10 = vector.multi_reduction <maximumf>, %3, %cst_8 [1] : vector<8x256xf32> to vector<8xf32>
    %11 = vector.shape_cast %10 : vector<8xf32> to vector<8x1xf32>
    %12 = arith.maximumf %9, %11 : vector<8x1xf32>
    %c0_9 = arith.constant 0 : index
    %c0_10 = arith.constant 0 : index
    %13 = vector.load %arg4[%c0_9, %c0_10] : memref<8x1xf32, #tpu.memory_space<vmem>>, vector<8x1xf32>
    tpu.vector_store %arg4[%c0_9, %c0_10], %12 {strides = array<i32>} : memref<8x1xf32, #tpu.memory_space<vmem>>, vector<8x1xf32>,
    return
  }
  func.func @transform_0(%arg0: i32, %arg1: i32) -> (i32, i32) {
    %c0_i32 = arith.constant 0 : i32
    return %arg0, %arg1 : i32, i32
  }
  func.func @transform_1(%arg0: i32, %arg1: i32) -> (i32, i32) {
    %c0_i32 = arith.constant 0 : i32
    %c0_i32_0 = arith.constant 0 : i32
    return %arg0, %c0_i32 : i32, i32
  }
  func.func @transform_2(%arg0: i32, %arg1: i32) -> (i32, i32) {
    %c0_i32 = arith.constant 0 : i32
    %c0_i32_0 = arith.constant 0 : i32
    return %arg0, %c0_i32 : i32, i32
  }
}

</mosaic_0001>

<llo_original>
// kernel: tpu_custom_call.1
$region0: #{tpu_custom_call.1}
  #allocation0 [shape = 'u32[]', space=smem, size = 0x4, offset = 0x4, fixed_abs, tag = 'smem constant byte address 0x4 - core index']
  #allocation1 [shape = 'u32[144,128]{1,0:T(1,128)}', space=vmem, size = 0x12000, scoped, tag = 'internal scratch']
  %s0 = inlined_call_operand.hbm [shape: f32[8,256], index: 0, kind: input, shape index: {}]
  %s1 = inlined_call_operand.vmem [shape: f32[8,1], index: 1, kind: output, shape index: {0}]
  %s2 = inlined_call_operand.vmem [shape: f32[8,1], index: 2, kind: output, shape index: {1}]
  %3 = xla_tuple %s1, %s2
  %s4 = sld [smem:[#allocation0]]
  $region30: #{tpu_custom_call.1} parent=0
    _
  %s6 = ssub.s32 1, %s4
  %s7 = scalar_select 0, %s6, %s4
  $region1: #{tpu_custom_call.1} parent=0
    #allocation2 [shape = 'u8[8192]{0}', space=vmem, size = 0x2000, scoped, tag = 'input window, operand 0, single buffered']
    #allocation3 [shape = 's32[1]{0}', space=sflag, size = 0x4, scoped, tag = 'scoped memory for tpu_custom_call.1']
    %8 = vsyncpa [#allocation3], 0
    // Predicated region
    $region2: #{tpu_custom_call.1} parent=1 // pred_check
      _
    $region3: #{tpu_custom_call.1} parent=1 // pred_check_branch
      %10 = sbr.rel (0) target = $region5
    $region4: #{tpu_custom_call.1} parent=1 // pred_region
      %s12 = ssub.s32 256, 256
      %13 = vsyncadd [#allocation3], %s12
      %s15 = sshll.u32 [#allocation2], 4
      %s16 = int_to_ptr.vmem [resolvable:$true] %s15
      %18 = dma.hbm_to_vmem [thread:$0]  %s0, 256, %s16, [#allocation3]
    $region5: #{tpu_custom_call.1} parent=1 // pred_fallthru
      _
    // Predicated region
    $region6: #{tpu_custom_call.1} parent=1 // pred_check
      _
    $region7: #{tpu_custom_call.1} parent=1 // pred_check_branch
      %20 = sbr.rel (0) target = $region9
    $region8: #{tpu_custom_call.1} parent=1 // pred_region
      %21 = dma.done [#allocation3], 256
    $region9: #{tpu_custom_call.1} parent=1 // pred_fallthru
      _
    %p22 = scmp.eq.s32.totalorder 0, 0
    // Predicated region
    $region10: #{tpu_custom_call.1} parent=1 // pred_check
      %p23 = pneg %p22
    $region11: #{tpu_custom_call.1} parent=1 // pred_check_branch
      %25 = sbr.rel (%p23) target = $region13
    $region12: #{tpu_custom_call.1} parent=1 // pred_region
      %vm26 = vcmask 7168
      %27 = vst.msk [vmem:[%s1] sm:$0xff] %vm26, 0.0
      %28 = vst.msk [vmem:[%s2] sm:$0xff] %vm26, 0.0
    $region13: #{tpu_custom_call.1} parent=1 // pred_fallthru
      _
    %v29 = vld [vmem:[#allocation2] sm:$0xff]
    %v30 = vld [vmem:[#allocation2 + $0x8] sm:$0xff]
    %v31 = vld [vmem:[%s1] sm:$0xff]
    %v32 = vmin.f32 %v29, %v30
    %33 = vmin.xlane.f32.xlu0 %v32
    %v34 = vpop.xlane.xlu0 %33
    %v35 = vmin.f32 %v31, %v34
    %vm36 = vcmask 7168
    %37 = vst.msk [vmem:[%s1] sm:$0xff] %vm36, %v35
    %v38 = vld [vmem:[%s2] sm:$0xff]
    %v39 = vmax.f32 %v29, %v30
    %40 = vmax.xlane.f32.xlu0 %v39
    %v41 = vpop.xlane.xlu0 %40
    %v42 = vmax.f32 %v38, %v41
    %43 = vst.msk [vmem:[%s2] sm:$0xff] %vm36, %v42
    // Predicated region
    $region14: #{tpu_custom_call.1} parent=1 // pred_check
      _
    $region15: #{tpu_custom_call.1} parent=1 // pred_check_branch
      %45 = sbr.rel (0) target = $region17
    $region16: #{tpu_custom_call.1} parent=1 // pred_region
      _
    $region17: #{tpu_custom_call.1} parent=1 // pred_fallthru
      _
    // Predicated region
    $region18: #{tpu_custom_call.1} parent=1 // pred_check
      _
    $region19: #{tpu_custom_call.1} parent=1 // pred_check_branch
      %47 = sbr.rel (0) target = $region21
    $region20: #{tpu_custom_call.1} parent=1 // pred_region
      _
    $region21: #{tpu_custom_call.1} parent=1 // pred_fallthru
      _
    // Predicated region
    $region22: #{tpu_custom_call.1} parent=1 // pred_check
      _
    $region23: #{tpu_custom_call.1} parent=1 // pred_check_branch
      %49 = sbr.rel (0) target = $region25
    $region24: #{tpu_custom_call.1} parent=1 // pred_region
      _
    $region25: #{tpu_custom_call.1} parent=1 // pred_fallthru
      _
    // Predicated region
    $region26: #{tpu_custom_call.1} parent=1 // pred_check
      _
    $region27: #{tpu_custom_call.1} parent=1 // pred_check_branch
      %51 = sbr.rel (0) target = $region29
    $region28: #{tpu_custom_call.1} parent=1 // pred_region
      _
    $region29: #{tpu_custom_call.1} parent=1 // pred_fallthru
      _
    %52 = vsyncpa [#allocation3], 1

</llo_original>
